<compile_context>
chip_gen: v7x
topology: tpu7x:2x2x1
jax: 0.10.0
libtpu: 0.0.40
codegen_flags: <defaults>
</compile_context>

<pallas_src>
import functools

import jax
import jax.numpy as jnp
from jax import lax
from jax.experimental import pallas as pl
from jax.experimental.pallas import tpu as pltpu

_EPS = 1e-12          # F.normalize eps
_NEG_BIG = -1e30      # finite "-inf" for masked logits (avoids inf-inf NaNs)

_TILE_N = 256         # query rows per block   (sublane axis, multiple of 8)
_TILE_M = 512         # negative keys per block (lane axis, multiple of 128)


def _round_up(x, m):
    return (x + m - 1) // m * m


def _l2_normalize(x):
    # x * rsqrt(max(|x|^2, eps^2)) == x / max(|x|, eps)  (F.normalize semantics)
    ss = jnp.sum(x * x, axis=-1, keepdims=True)
    return x * lax.rsqrt(jnp.maximum(ss, jnp.float32(_EPS * _EPS)))


def _dot_nt(a, b):
    # (R, D) x (C, D) -> (R, C): contract last dims of BOTH operands so Mosaic
    # feeds the MXU directly, no in-kernel transpose.
    return lax.dot_general(a, b, dimension_numbers=(((1,), (1,)), ((), ())),
                           preferred_element_type=jnp.float32)


# ---------------------------------------------------------------------------
# Kernel 1: explicit negative keys, negative_mode == 'unpaired'
#   loss_i = logsumexp([pos_i, neg_i,:] / t) - pos_i / t   (label 0)
# Grid: (N_tiles [parallel], M_tiles [arbitrary, online LSE]).
# ---------------------------------------------------------------------------
def _infonce_unpaired_kernel(q_ref, p_ref, n_ref, o_ref,
                             qn_ref, pos_ref, m_ref, l_ref, *,
                             temperature, m_valid, tile_m, mxu_dtype):
    # Grid indices hoisted to the top of the body (never call pl.program_id
    # inside a pl.when region).
    j = pl.program_id(1)
    last_j = pl.num_programs(1) - 1
    inv_t = jnp.float32(1.0 / temperature)

    @pl.when(j == 0)
    def _init():
        q = q_ref[...].astype(jnp.float32)
        p = p_ref[...].astype(jnp.float32)
        qn = _l2_normalize(q) * inv_t            # fold 1/t into q once
        pn = _l2_normalize(p)
        pos = jnp.sum(qn * pn, axis=-1, keepdims=True)   # already scaled by 1/t
        qn_ref[...] = qn.astype(qn_ref.dtype)
        pos_ref[...] = pos
        m_ref[...] = pos                          # running max starts at pos logit
        l_ref[...] = jnp.ones_like(pos)           # exp(pos - pos) == 1

    nn_ = _l2_normalize(n_ref[...].astype(jnp.float32)).astype(mxu_dtype)
    s = _dot_nt(qn_ref[...], nn_)                 # (tile_n, tile_m), scaled by 1/t

    if m_valid % tile_m != 0:                     # static: only if M was padded
        col = j * tile_m + lax.broadcasted_iota(jnp.int32, s.shape, 1)
        s = jnp.where(col < m_valid, s, _NEG_BIG)

    m_old = m_ref[...]
    m_new = jnp.maximum(m_old, jnp.max(s, axis=-1, keepdims=True))
    l_ref[...] = (l_ref[...] * jnp.exp(m_old - m_new)
                  + jnp.sum(jnp.exp(s - m_new), axis=-1, keepdims=True))
    m_ref[...] = m_new

    @pl.when(j == last_j)
    def _finalize():
        # Padded query rows are discarded by the wrapper's [:n] slice, so no
        # row masking (and no pl.program_id) is needed here.
        o_ref[...] = m_ref[...] + jnp.log(l_ref[...]) - pos_ref[...]


# ---------------------------------------------------------------------------
# Kernel 2: in-batch negatives (no explicit negative keys)
#   logits = (q @ keys^T) / t, labels = arange(N)
#   loss_i = logsumexp(logits_i,:) - logits_i,i
# Same online-LSE structure; the diagonal is a direct row-wise dot product.
# ---------------------------------------------------------------------------
def _infonce_selfneg_kernel(q_ref, prow_ref, pcol_ref, o_ref,
                            qn_ref, diag_ref, m_ref, l_ref, *,
                            temperature, n_valid, tile_c, mxu_dtype):
    j = pl.program_id(1)
    last_j = pl.num_programs(1) - 1
    inv_t = jnp.float32(1.0 / temperature)

    @pl.when(j == 0)
    def _init():
        qn = _l2_normalize(q_ref[...].astype(jnp.float32)) * inv_t
        pn = _l2_normalize(prow_ref[...].astype(jnp.float32))
        diag_ref[...] = jnp.sum(qn * pn, axis=-1, keepdims=True)  # scaled by 1/t
        qn_ref[...] = qn.astype(qn_ref.dtype)
        m_ref[...] = jnp.full(m_ref.shape, _NEG_BIG, dtype=jnp.float32)
        l_ref[...] = jnp.zeros(l_ref.shape, dtype=jnp.float32)

    pc = _l2_normalize(pcol_ref[...].astype(jnp.float32)).astype(mxu_dtype)
    s = _dot_nt(qn_ref[...], pc)                  # (tile_r, tile_c), scaled by 1/t

    if n_valid % tile_c != 0:                     # static: only if N was padded
        col = j * tile_c + lax.broadcasted_iota(jnp.int32, s.shape, 1)
        s = jnp.where(col < n_valid, s, _NEG_BIG)

    m_old = m_ref[...]
    m_new = jnp.maximum(m_old, jnp.max(s, axis=-1, keepdims=True))
    l_ref[...] = (l_ref[...] * jnp.exp(m_old - m_new)
                  + jnp.sum(jnp.exp(s - m_new), axis=-1, keepdims=True))
    m_ref[...] = m_new

    @pl.when(j == last_j)
    def _finalize():
        # Padded rows are discarded by the wrapper's [:n] slice.
        o_ref[...] = m_ref[...] + jnp.log(l_ref[...]) - diag_ref[...]


# ---------------------------------------------------------------------------
# pallas_call wrappers
# ---------------------------------------------------------------------------
def _unpaired_row_losses(query, positive_key, negative_keys, temperature, mxu_dtype):
    n, d = query.shape
    m = negative_keys.shape[0]

    tile_n = min(_TILE_N, _round_up(n, 8))
    tile_m = min(_TILE_M, _round_up(m, 128))
    n_pad = _round_up(n, tile_n)
    m_pad = _round_up(m, tile_m)

    q = jnp.pad(query, ((0, n_pad - n), (0, 0)))
    p = jnp.pad(positive_key, ((0, n_pad - n), (0, 0)))
    nk = jnp.pad(negative_keys, ((0, m_pad - m), (0, 0)))

    grid = (n_pad // tile_n, m_pad // tile_m)
    kernel = functools.partial(
        _infonce_unpaired_kernel, temperature=float(temperature),
        m_valid=m, tile_m=tile_m, mxu_dtype=mxu_dtype)

    per_row = pl.pallas_call(
        kernel,
        out_shape=jax.ShapeDtypeStruct((n_pad, 1), jnp.float32),
        grid_spec=pltpu.PrefetchScalarGridSpec(
            num_scalar_prefetch=0,
            grid=grid,
            in_specs=[
                pl.BlockSpec((tile_n, d), lambda i, j: (i, 0)),   # query rows
                pl.BlockSpec((tile_n, d), lambda i, j: (i, 0)),   # positive rows
                pl.BlockSpec((tile_m, d), lambda i, j: (j, 0)),   # negative tile
            ],
            out_specs=pl.BlockSpec((tile_n, 1), lambda i, j: (i, 0)),
            scratch_shapes=[
                pltpu.VMEM((tile_n, d), mxu_dtype),    # normalized, 1/t-scaled q
                pltpu.VMEM((tile_n, 1), jnp.float32),  # positive logit
                pltpu.VMEM((tile_n, 1), jnp.float32),  # running max
                pltpu.VMEM((tile_n, 1), jnp.float32),  # running exp-sum
            ],
        ),
        compiler_params=pltpu.CompilerParams(
            dimension_semantics=("parallel", "arbitrary")),
    )(q, p, nk)
    return per_row[:n, 0]


def _selfneg_row_losses(query, keys, temperature, mxu_dtype):
    # Row-wise cross entropy of (query @ keys^T) / t with labels = arange(N).
    n, d = query.shape
    tile = min(256, _round_up(n, 128))
    n_pad = _round_up(n, tile)

    q = jnp.pad(query, ((0, n_pad - n), (0, 0)))
    p = jnp.pad(keys, ((0, n_pad - n), (0, 0)))

    grid = (n_pad // tile, n_pad // tile)
    kernel = functools.partial(
        _infonce_selfneg_kernel, temperature=float(temperature),
        n_valid=n, tile_c=tile, mxu_dtype=mxu_dtype)

    per_row = pl.pallas_call(
        kernel,
        out_shape=jax.ShapeDtypeStruct((n_pad, 1), jnp.float32),
        grid_spec=pltpu.PrefetchScalarGridSpec(
            num_scalar_prefetch=0,
            grid=grid,
            in_specs=[
                pl.BlockSpec((tile, d), lambda i, j: (i, 0)),   # query rows
                pl.BlockSpec((tile, d), lambda i, j: (i, 0)),   # keys (row-aligned, diag)
                pl.BlockSpec((tile, d), lambda i, j: (j, 0)),   # keys (column tile)
            ],
            out_specs=pl.BlockSpec((tile, 1), lambda i, j: (i, 0)),
            scratch_shapes=[
                pltpu.VMEM((tile, d), mxu_dtype),
                pltpu.VMEM((tile, 1), jnp.float32),
                pltpu.VMEM((tile, 1), jnp.float32),
                pltpu.VMEM((tile, 1), jnp.float32),
            ],
        ),
        compiler_params=pltpu.CompilerParams(
            dimension_semantics=("parallel", "arbitrary")),
    )(q, p, p)
    return per_row[:n, 0]


# ---------------------------------------------------------------------------
# Public wrapper: mirrors InfoNCE.forward
# ---------------------------------------------------------------------------
def info_nce_pallas(query, positive_key, negative_keys=None,
                    temperature=0.1, reduction='mean',
                    negative_mode='unpaired', symmetric=False):
    if query.ndim != 2:
        raise ValueError('<query> must have 2 dimensions.')
    if positive_key.ndim != 2:
        raise ValueError('<positive_key> must have 2 dimensions.')
    if query.shape[0] != positive_key.shape[0]:
        raise ValueError('<query> and <positive_key> must have the same number of samples.')
    if query.shape[-1] != positive_key.shape[-1]:
        raise ValueError('<query>/<positive_key> embedding dims must match.')

    # bf16 MXU operands only when inputs are already bf16; math stays f32.
    mxu_dtype = (jnp.bfloat16
                 if (query.dtype == jnp.bfloat16 and positive_key.dtype == jnp.bfloat16
                     and (negative_keys is None or negative_keys.dtype == jnp.bfloat16))
                 else jnp.float32)

    if negative_keys is not None:
        if negative_mode == 'paired':
            # TODO(synk): negative_mode='paired' ((N, M, D) negatives) not implemented.
            raise NotImplementedError("negative_mode='paired' is not implemented")
        if negative_mode != 'unpaired':
            raise ValueError("negative_mode must be one of ['paired', 'unpaired']")
        if negative_keys.ndim != 2:
            raise ValueError("<negative_keys> must have 2 dimensions if negative_mode == 'unpaired'.")
        if negative_keys.shape[-1] != query.shape[-1]:
            raise ValueError('<negative_keys> embedding dim must match <query>.')
        per_row = _unpaired_row_losses(query, positive_key, negative_keys,
                                       temperature, mxu_dtype)
    else:
        per_row = _selfneg_row_losses(query, positive_key, temperature, mxu_dtype)
        if symmetric:
            per_row_t = _selfneg_row_losses(positive_key, query, temperature, mxu_dtype)
            per_row = 0.5 * per_row + 0.5 * per_row_t

    if reduction == 'mean':
        return jnp.mean(per_row)
    if reduction == 'sum':
        return jnp.sum(per_row)
    if reduction == 'none':
        return per_row
    raise ValueError("reduction must be one of ['none', 'sum', 'mean']")


# ---------------------------------------------------------------------------
# Pure-JAX reference (sanity check)
# ---------------------------------------------------------------------------
def _ref_info_nce(query, positive_key, negative_keys=None,
                  temperature=0.1, symmetric=False):
    qn = _l2_normalize(query.astype(jnp.float32))
    pn = _l2_normalize(positive_key.astype(jnp.float32))
    if negative_keys is not None:
        nn_ = _l2_normalize(negative_keys.astype(jnp.float32))
        pos = jnp.sum(qn * pn, axis=-1, keepdims=True)
        neg = qn @ nn_.T
        logits = jnp.concatenate([pos, neg], axis=1) / temperature
        lse = jax.scipy.special.logsumexp(logits, axis=-1)
        return jnp.mean(lse - logits[:, 0])
    logits = (qn @ pn.T) / temperature
    labels = jnp.arange(logits.shape[0])
    lse = jax.scipy.special.logsumexp(logits, axis=-1)
    loss1 = jnp.mean(lse - logits[labels, labels])
    if symmetric:
        lse2 = jax.scipy.special.logsumexp(logits.T, axis=-1)
        loss2 = jnp.mean(lse2 - logits[labels, labels])
        return 0.5 * loss1 + 0.5 * loss2
    return loss1


if __name__ == "__main__":
    key = jax.random.PRNGKey(0)
    k1, k2, k3 = jax.random.split(key, 3)

    # Shapes from the module's docstring example (small).
    N, M, D = 32, 48, 128
    query = jax.random.normal(k1, (N, D), dtype=jnp.float32)
    positive_key = jax.random.normal(k2, (N, D), dtype=jnp.float32)
    negative_keys = jax.random.normal(k3, (M, D), dtype=jnp.float32)

    # Path 1: unpaired explicit negatives (default InfoNCE config).
    loss_unpaired = info_nce_pallas(query, positive_key, negative_keys,
                                    temperature=0.1)
    # Path 2: no negatives (in-batch negatives), non-symmetric and symmetric.
    loss_self = info_nce_pallas(query, positive_key, None, temperature=0.1)
    loss_self_sym = info_nce_pallas(query, positive_key, None,
                                    temperature=0.1, symmetric=True)
    jax.block_until_ready((loss_unpaired, loss_self, loss_self_sym))

    ref_unpaired = _ref_info_nce(query, positive_key, negative_keys, 0.1)
    ref_self = _ref_info_nce(query, positive_key, None, 0.1)
    ref_self_sym = _ref_info_nce(query, positive_key, None, 0.1, symmetric=True)

    assert jnp.allclose(loss_unpaired, ref_unpaired, rtol=1e-4, atol=1e-4), \
        (loss_unpaired, ref_unpaired)
    assert jnp.allclose(loss_self, ref_self, rtol=1e-4, atol=1e-4), \
        (loss_self, ref_self)
    assert jnp.allclose(loss_self_sym, ref_self_sym, rtol=1e-4, atol=1e-4), \
        (loss_self_sym, ref_self_sym)

    print("KERNEL_OK")
</pallas_src>

<mosaic_0001>
module attributes {stable_mosaic.version = 11 : i64} {
  func.func @_infonce_unpaired_kernel(%arg0: i32, %arg1: i32, %arg2: memref<32x128xf32, #tpu.memory_space<vmem>>, %arg3: memref<32x128xf32, #tpu.memory_space<vmem>>, %arg4: memref<128x128xf32, #tpu.memory_space<vmem>>, %arg5: memref<32x1xf32, #tpu.memory_space<vmem>>, %arg6: memref<32x128xf32, #tpu.memory_space<vmem>>, %arg7: memref<32x1xf32, #tpu.memory_space<vmem>>, %arg8: memref<32x1xf32, #tpu.memory_space<vmem>>, %arg9: memref<32x1xf32, #tpu.memory_space<vmem>>) attributes {dimension_semantics = [#tpu.dimension_semantics<parallel>, #tpu.dimension_semantics<arbitrary>], iteration_bounds = array<i64: 1, 1>, scalar_prefetch = 0 : i64, scratch_operands = 4 : i64, tpu.core_type = #tpu.core_type<tc>, window_params = [{transform_indices = @transform_0, window_bounds = array<i64: 32, 128>}, {transform_indices = @transform_1, window_bounds = array<i64: 32, 128>}, {transform_indices = @transform_2, window_bounds = array<i64: 128, 128>}, {transform_indices = @transform_3, window_bounds = array<i64: 32, 1>}]} {
    %c0_i32 = arith.constant 0 : i32
    %0 = arith.cmpi eq, %arg1, %c0_i32 : i32
    %1 = arith.extui %0 : i1 to i32
    %cst = arith.constant 1.000000e+01 : f32
    %c0_i32_0 = arith.constant 0 : i32
    %2 = arith.cmpi ne, %1, %c0_i32_0 : i32
    scf.if %2 {
      %c0_20 = arith.constant 0 : index
      %c0_21 = arith.constant 0 : index
      %41 = vector.load %arg2[%c0_20, %c0_21] : memref<32x128xf32, #tpu.memory_space<vmem>>, vector<32x128xf32>
      %c0_22 = arith.constant 0 : index
      %c0_23 = arith.constant 0 : index
      %42 = vector.load %arg3[%c0_22, %c0_23] : memref<32x128xf32, #tpu.memory_space<vmem>>, vector<32x128xf32>
      %43 = arith.mulf %41, %41 : vector<32x128xf32>
      %cst_24 = arith.constant dense<0.000000e+00> : vector<32xf32>
      %44 = vector.multi_reduction <add>, %43, %cst_24 [1] : vector<32x128xf32> to vector<32xf32>
      %45 = vector.shape_cast %44 : vector<32xf32> to vector<32x1xf32>
      %cst_25 = arith.constant 1.000000e-24 : f32
      %46 = vector.broadcast %cst_25 : f32 to vector<32x1xf32>
      %47 = arith.maximumf %45, %46 : vector<32x1xf32>
      %48 = math.rsqrt %47 : vector<32x1xf32>
      %49 = vector.broadcast %48 : vector<32x1xf32> to vector<32x128xf32>
      %50 = arith.mulf %41, %49 : vector<32x128xf32>
      %51 = vector.broadcast %cst : f32 to vector<32x128xf32>
      %52 = arith.mulf %50, %51 : vector<32x128xf32>
      %53 = arith.mulf %42, %42 : vector<32x128xf32>
      %cst_26 = arith.constant dense<0.000000e+00> : vector<32xf32>
      %54 = vector.multi_reduction <add>, %53, %cst_26 [1] : vector<32x128xf32> to vector<32xf32>
      %55 = vector.shape_cast %54 : vector<32xf32> to vector<32x1xf32>
      %cst_27 = arith.constant 1.000000e-24 : f32
      %56 = vector.broadcast %cst_27 : f32 to vector<32x1xf32>
      %57 = arith.maximumf %55, %56 : vector<32x1xf32>
      %58 = math.rsqrt %57 : vector<32x1xf32>
      %59 = vector.broadcast %58 : vector<32x1xf32> to vector<32x128xf32>
      %60 = arith.mulf %42, %59 : vector<32x128xf32>
      %61 = arith.mulf %52, %60 : vector<32x128xf32>
      %cst_28 = arith.constant dense<0.000000e+00> : vector<32xf32>
      %62 = vector.multi_reduction <add>, %61, %cst_28 [1] : vector<32x128xf32> to vector<32xf32>
      %63 = vector.shape_cast %62 : vector<32xf32> to vector<32x1xf32>
      %c0_29 = arith.constant 0 : index
      %c0_30 = arith.constant 0 : index
      %64 = vector.load %arg6[%c0_29, %c0_30] : memref<32x128xf32, #tpu.memory_space<vmem>>, vector<32x128xf32>
      tpu.vector_store %arg6[%c0_29, %c0_30], %52 {strides = array<i32>} : memref<32x128xf32, #tpu.memory_space<vmem>>, vector<32x128xf32>,
      %c0_31 = arith.constant 0 : index
      %c0_32 = arith.constant 0 : index
      %65 = vector.load %arg7[%c0_31, %c0_32] : memref<32x1xf32, #tpu.memory_space<vmem>>, vector<32x1xf32>
      tpu.vector_store %arg7[%c0_31, %c0_32], %63 {strides = array<i32>} : memref<32x1xf32, #tpu.memory_space<vmem>>, vector<32x1xf32>,
      %c0_33 = arith.constant 0 : index
      %c0_34 = arith.constant 0 : index
      %66 = vector.load %arg8[%c0_33, %c0_34] : memref<32x1xf32, #tpu.memory_space<vmem>>, vector<32x1xf32>
      tpu.vector_store %arg8[%c0_33, %c0_34], %63 {strides = array<i32>} : memref<32x1xf32, #tpu.memory_space<vmem>>, vector<32x1xf32>,
      %cst_35 = arith.constant 1.000000e+00 : f32
      %67 = vector.broadcast %cst_35 : f32 to vector<32x1xf32>
      %c0_36 = arith.constant 0 : index
      %c0_37 = arith.constant 0 : index
      %68 = vector.load %arg9[%c0_36, %c0_37] : memref<32x1xf32, #tpu.memory_space<vmem>>, vector<32x1xf32>
      tpu.vector_store %arg9[%c0_36, %c0_37], %67 {strides = array<i32>} : memref<32x1xf32, #tpu.memory_space<vmem>>, vector<32x1xf32>,
    } else {
    }
    %c0 = arith.constant 0 : index
    %c0_1 = arith.constant 0 : index
    %3 = vector.load %arg4[%c0, %c0_1] : memref<128x128xf32, #tpu.memory_space<vmem>>, vector<128x128xf32>
    %4 = arith.mulf %3, %3 : vector<128x128xf32>
    %cst_2 = arith.constant dense<0.000000e+00> : vector<128xf32>
    %5 = vector.multi_reduction <add>, %4, %cst_2 [1] : vector<128x128xf32> to vector<128xf32>
    %6 = vector.shape_cast %5 : vector<128xf32> to vector<128x1xf32>
    %cst_3 = arith.constant 1.000000e-24 : f32
    %7 = vector.broadcast %cst_3 : f32 to vector<128x1xf32>
    %8 = arith.maximumf %6, %7 : vector<128x1xf32>
    %9 = math.rsqrt %8 : vector<128x1xf32>
    %10 = vector.broadcast %9 : vector<128x1xf32> to vector<128x128xf32>
    %11 = arith.mulf %3, %10 : vector<128x128xf32>
    %c0_4 = arith.constant 0 : index
    %c0_5 = arith.constant 0 : index
    %12 = vector.load %arg6[%c0_4, %c0_5] : memref<32x128xf32, #tpu.memory_space<vmem>>, vector<32x128xf32>
    %cst_6 = arith.constant dense<0.000000e+00> : vector<32x128xf32>
    %13 = tpu.matmul %12, %11, %cst_6 {dimension_numbers = #tpu.dot_dimension_numbers<[1], [1], [0], [0], [0, 0, 1, 0], [], []>} : vector<32x128xf32>, vector<128x128xf32>, vector<32x128xf32> -> vector<32x128xf32>
    %c128_i32 = arith.constant 128 : i32
    %14 = arith.muli %arg1, %c128_i32 : i32
    %15 = tpu.iota {dimensions = array<i32: 1>} : vector<32x128xi32>
    %16 = vector.broadcast %14 : i32 to vector<32x128xi32>
    %17 = arith.addi %16, %15 : vector<32x128xi32>
    %c48_i32 = arith.constant 48 : i32
    %18 = vector.broadcast %c48_i32 : i32 to vector<32x128xi32>
    %19 = arith.cmpi slt, %17, %18 : vector<32x128xi32>
    %cst_7 = arith.constant -1.000000e+30 : f32
    %20 = vector.broadcast %cst_7 : f32 to vector<32x128xf32>
    %21 = arith.select %19, %13, %20 : vector<32x128xi1>, vector<32x128xf32>
    %c0_8 = arith.constant 0 : index
    %c0_9 = arith.constant 0 : index
    %22 = vector.load %arg8[%c0_8, %c0_9] : memref<32x1xf32, #tpu.memory_space<vmem>>, vector<32x1xf32>
    %cst_10 = arith.constant dense<0xFF800000> : vector<32xf32>
    %23 = vector.multi_reduction <maximumf>, %21, %cst_10 [1] : vector<32x128xf32> to vector<32xf32>
    %24 = vector.shape_cast %23 : vector<32xf32> to vector<32x1xf32>
    %25 = arith.maximumf %22, %24 : vector<32x1xf32>
    %c0_11 = arith.constant 0 : index
    %c0_12 = arith.constant 0 : index
    %26 = vector.load %arg9[%c0_11, %c0_12] : memref<32x1xf32, #tpu.memory_space<vmem>>, vector<32x1xf32>
    %27 = arith.subf %22, %25 : vector<32x1xf32>
    %28 = math.exp %27 : vector<32x1xf32>
    %29 = arith.mulf %26, %28 : vector<32x1xf32>
    %30 = vector.broadcast %25 : vector<32x1xf32> to vector<32x128xf32>
    %31 = arith.subf %21, %30 : vector<32x128xf32>
    %32 = math.exp %31 : vector<32x128xf32>
    %cst_13 = arith.constant dense<0.000000e+00> : vector<32xf32>
    %33 = vector.multi_reduction <add>, %32, %cst_13 [1] : vector<32x128xf32> to vector<32xf32>
    %34 = vector.shape_cast %33 : vector<32xf32> to vector<32x1xf32>
    %35 = arith.addf %29, %34 : vector<32x1xf32>
    %c0_14 = arith.constant 0 : index
    %c0_15 = arith.constant 0 : index
    %36 = vector.load %arg9[%c0_14, %c0_15] : memref<32x1xf32, #tpu.memory_space<vmem>>, vector<32x1xf32>
    tpu.vector_store %arg9[%c0_14, %c0_15], %35 {strides = array<i32>} : memref<32x1xf32, #tpu.memory_space<vmem>>, vector<32x1xf32>,
    %c0_16 = arith.constant 0 : index
    %c0_17 = arith.constant 0 : index
    %37 = vector.load %arg8[%c0_16, %c0_17] : memref<32x1xf32, #tpu.memory_space<vmem>>, vector<32x1xf32>
    tpu.vector_store %arg8[%c0_16, %c0_17], %25 {strides = array<i32>} : memref<32x1xf32, #tpu.memory_space<vmem>>, vector<32x1xf32>,
    %c0_i32_18 = arith.constant 0 : i32
    %38 = arith.cmpi eq, %arg1, %c0_i32_18 : i32
    %39 = arith.extui %38 : i1 to i32
    %c0_i32_19 = arith.constant 0 : i32
    %40 = arith.cmpi ne, %39, %c0_i32_19 : i32
    scf.if %40 {
      %c0_20 = arith.constant 0 : index
      %c0_21 = arith.constant 0 : index
      %41 = vector.load %arg8[%c0_20, %c0_21] : memref<32x1xf32, #tpu.memory_space<vmem>>, vector<32x1xf32>
      %c0_22 = arith.constant 0 : index
      %c0_23 = arith.constant 0 : index
      %42 = vector.load %arg9[%c0_22, %c0_23] : memref<32x1xf32, #tpu.memory_space<vmem>>, vector<32x1xf32>
      %43 = math.log %42 : vector<32x1xf32>
      %44 = arith.addf %41, %43 : vector<32x1xf32>
      %c0_24 = arith.constant 0 : index
      %c0_25 = arith.constant 0 : index
      %45 = vector.load %arg7[%c0_24, %c0_25] : memref<32x1xf32, #tpu.memory_space<vmem>>, vector<32x1xf32>
      %46 = arith.subf %44, %45 : vector<32x1xf32>
      %c0_26 = arith.constant 0 : index
      %c0_27 = arith.constant 0 : index
      %47 = vector.load %arg5[%c0_26, %c0_27] : memref<32x1xf32, #tpu.memory_space<vmem>>, vector<32x1xf32>
      tpu.vector_store %arg5[%c0_26, %c0_27], %46 {strides = array<i32>} : memref<32x1xf32, #tpu.memory_space<vmem>>, vector<32x1xf32>,
    } else {
    }
    return
  }
  func.func @transform_0(%arg0: i32, %arg1: i32) -> (i32, i32) {
    %c0_i32 = arith.constant 0 : i32
    %c0_i32_0 = arith.constant 0 : i32
    return %arg0, %c0_i32 : i32, i32
  }
  func.func @transform_1(%arg0: i32, %arg1: i32) -> (i32, i32) {
    %c0_i32 = arith.constant 0 : i32
    %c0_i32_0 = arith.constant 0 : i32
    return %arg0, %c0_i32 : i32, i32
  }
  func.func @transform_2(%arg0: i32, %arg1: i32) -> (i32, i32) {
    %c0_i32 = arith.constant 0 : i32
    %c0_i32_0 = arith.constant 0 : i32
    return %arg1, %c0_i32 : i32, i32
  }
  func.func @transform_3(%arg0: i32, %arg1: i32) -> (i32, i32) {
    %c0_i32 = arith.constant 0 : i32
    %c0_i32_0 = arith.constant 0 : i32
    return %arg0, %c0_i32 : i32, i32
  }
}

</mosaic_0001>

<llo_original>
// kernel: tpu_custom_call.1
$region0: #{tpu_custom_call.1}
  #allocation0 [shape = 'u32[]', space=smem, size = 0x4, offset = 0x4, fixed_abs, tag = 'smem constant byte address 0x4 - core index']
  #allocation1 [shape = 'u32[144,128]{1,0:T(1,128)}', space=vmem, size = 0x12000, scoped, tag = 'internal scratch']
  #allocation2 [shape = 'f32[32,128]{1,0:T(8,128)}', space=vmem, size = 0x4000, scoped, tag = 'scratch operand']
  #allocation3 [shape = 'f32[32,1]{1,0:T(8,128)}', space=vmem, size = 0x4000, scoped, tag = 'scratch operand']
  #allocation4 [shape = 'f32[32,1]{1,0:T(8,128)}', space=vmem, size = 0x4000, scoped, tag = 'scratch operand']
  #allocation5 [shape = 'f32[32,1]{1,0:T(8,128)}', space=vmem, size = 0x4000, scoped, tag = 'scratch operand']
  %s0 = inlined_call_operand.hbm [shape: f32[32,128], index: 0, kind: input, shape index: {}]
  %s1 = inlined_call_operand.hbm [shape: f32[32,128], index: 1, kind: input, shape index: {}]
  %s2 = inlined_call_operand.hbm [shape: f32[128,128], index: 2, kind: input, shape index: {}]
  %s3 = inlined_call_operand.vmem [shape: f32[32,1], index: 3, kind: output, shape index: {}]
  %s4 = sld [smem:[#allocation0]]
  $region42: #{tpu_custom_call.1} parent=0
    _
  %s6 = ssub.s32 1, %s4
  %s7 = scalar_select 0, %s6, %s4
  $region1: #{tpu_custom_call.1} parent=0
    #allocation6 [shape = 'u8[16384]{0}', space=vmem, size = 0x4000, scoped, tag = 'input window, operand 0, single buffered']
    #allocation7 [shape = 's32[1]{0}', space=sflag, size = 0x4, scoped, tag = 'scoped memory for tpu_custom_call.1']
    #allocation8 [shape = 'u8[16384]{0}', space=vmem, size = 0x4000, scoped, tag = 'input window, operand 1, single buffered']
    #allocation9 [shape = 's32[1]{0}', space=sflag, size = 0x4, scoped, tag = 'scoped memory for tpu_custom_call.1']
    #allocation10 [shape = 'u8[65536]{0}', space=vmem, size = 0x10000, scoped, tag = 'input window, operand 2, single buffered']
    %8 = vsyncpa [#allocation7], 0
    %9 = vsyncpa [#allocation9], 0
    // Predicated region
    $region2: #{tpu_custom_call.1} parent=1 // pred_check
      _
    $region3: #{tpu_custom_call.1} parent=1 // pred_check_branch
      %11 = sbr.rel (0) target = $region5
    $region4: #{tpu_custom_call.1} parent=1 // pred_region
      %s13 = ssub.s32 512, 512
      %14 = vsyncadd [#allocation7], %s13
      %s15 = sshll.u32 [#allocation6], 4
      %s16 = int_to_ptr.vmem [resolvable:$true] %s15
      %21 = dma.hbm_to_vmem [thread:$0]  %s0, 512, %s16, [#allocation7], 128, 128, 8
    $region5: #{tpu_custom_call.1} parent=1 // pred_fallthru
      _
    // Predicated region
    $region6: #{tpu_custom_call.1} parent=1 // pred_check
      _
    $region7: #{tpu_custom_call.1} parent=1 // pred_check_branch
      %23 = sbr.rel (0) target = $region9
    $region8: #{tpu_custom_call.1} parent=1 // pred_region
      %s25 = ssub.s32 512, 512
      %26 = vsyncadd [#allocation9], %s25
      %s27 = sshll.u32 [#allocation8], 4
      %s28 = int_to_ptr.vmem [resolvable:$true] %s27
      %33 = dma.hbm_to_vmem [thread:$0]  %s1, 512, %s28, [#allocation9], 128, 128, 8
    $region9: #{tpu_custom_call.1} parent=1 // pred_fallthru
      _
    // Predicated region
    $region10: #{tpu_custom_call.1} parent=1 // pred_check
      _
    $region11: #{tpu_custom_call.1} parent=1 // pred_check_branch
      %35 = sbr.rel (0) target = $region13
    $region12: #{tpu_custom_call.1} parent=1 // pred_region
      %s37 = ssub.s32 2048, 2048
      %38 = vsyncadd [#allocation9], %s37
      %s39 = sshll.u32 [#allocation10], 4
      %s40 = int_to_ptr.vmem [resolvable:$true] %s39
      %45 = dma.hbm_to_vmem [thread:$0]  %s2, 2048, %s40, [#allocation9], 128, 128, 8
    $region13: #{tpu_custom_call.1} parent=1 // pred_fallthru
      _
    // Predicated region
    $region14: #{tpu_custom_call.1} parent=1 // pred_check
      _
    $region15: #{tpu_custom_call.1} parent=1 // pred_check_branch
      %47 = sbr.rel (0) target = $region17
    $region16: #{tpu_custom_call.1} parent=1 // pred_region
      %48 = dma.done [#allocation7], 512
    $region17: #{tpu_custom_call.1} parent=1 // pred_fallthru
      _
    // Predicated region
    $region18: #{tpu_custom_call.1} parent=1 // pred_check
      _
    $region19: #{tpu_custom_call.1} parent=1 // pred_check_branch
      %50 = sbr.rel (0) target = $region21
    $region20: #{tpu_custom_call.1} parent=1 // pred_region
      %51 = dma.done [#allocation9], 512
    $region21: #{tpu_custom_call.1} parent=1 // pred_fallthru
      _
    // Predicated region
    $region22: #{tpu_custom_call.1} parent=1 // pred_check
      _
    $region23: #{tpu_custom_call.1} parent=1 // pred_check_branch
      %53 = sbr.rel (0) target = $region25
    $region24: #{tpu_custom_call.1} parent=1 // pred_region
      %54 = dma.done [#allocation9], 2048
    $region25: #{tpu_custom_call.1} parent=1 // pred_fallthru
      _
    %p55 = scmp.eq.s32.totalorder 0, 0
    // Predicated region
    $region26: #{tpu_custom_call.1} parent=1 // pred_check
      %p56 = pneg %p55
    $region27: #{tpu_custom_call.1} parent=1 // pred_check_branch
      %58 = sbr.rel (%p56) target = $region29
    $region28: #{tpu_custom_call.1} parent=1 // pred_region
      %v59 = vld [vmem:[#allocation6] sm:$0xff]
      %v60 = vld [vmem:[#allocation6 + $0x8] sm:$0xff]
      %v61 = vld [vmem:[#allocation6 + $0x10] sm:$0xff]
      %v62 = vld [vmem:[#allocation6 + $0x18] sm:$0xff]
      %v63 = vld [vmem:[#allocation8] sm:$0xff]
      %v64 = vld [vmem:[#allocation8 + $0x8] sm:$0xff]
      %v65 = vld [vmem:[#allocation8 + $0x10] sm:$0xff]
      %v66 = vld [vmem:[#allocation8 + $0x18] sm:$0xff]
      %v67 = vmul.f32 %v59, %v59
      %v68 = vmul.f32 %v60, %v60
      %v69 = vmul.f32 %v61, %v61
      %v70 = vmul.f32 %v62, %v62
      %71 = vadd.xlane.f32.xlu0 %v67
      %v72 = vpop.xlane.xlu0 %71
      %73 = vadd.xlane.f32.xlu0 %v68
      %v74 = vpop.xlane.xlu0 %73
      %75 = vadd.xlane.f32.xlu0 %v69
      %v76 = vpop.xlane.xlu0 %75
      %77 = vadd.xlane.f32.xlu0 %v70
      %v78 = vpop.xlane.xlu0 %77
      %v79 = vmax.f32 %v72, 1e-24
      %v80 = vmax.f32 %v74, 1e-24
      %v81 = vmax.f32 %v76, 1e-24
      %v82 = vmax.f32 %v78, 1e-24
      %v83 = vrsqrt.pop %v79
      %v84 = vrsqrt.pop %v80
      %v85 = vrsqrt.pop %v81
      %v86 = vrsqrt.pop %v82
      %v87 = vmul.f32 %v59, %v83
      %v88 = vmul.f32 %v60, %v84
      %v89 = vmul.f32 %v61, %v85
      %v90 = vmul.f32 %v62, %v86
      %v91 = vmul.f32 %v87, 10.0
      %v92 = vmul.f32 %v88, 10.0
      %v93 = vmul.f32 %v89, 10.0
      %v94 = vmul.f32 %v90, 10.0
      %v95 = vmul.f32 %v63, %v63
      %v96 = vmul.f32 %v64, %v64
      %v97 = vmul.f32 %v65, %v65
      %v98 = vmul.f32 %v66, %v66
      %99 = vadd.xlane.f32.xlu0 %v95
      %v100 = vpop.xlane.xlu0 %99
      %101 = vadd.xlane.f32.xlu0 %v96
      %v102 = vpop.xlane.xlu0 %101
      %103 = vadd.xlane.f32.xlu0 %v97
      %v104 = vpop.xlane.xlu0 %103
      %105 = vadd.xlane.f32.xlu0 %v98
      %v106 = vpop.xlane.xlu0 %105
      %v107 = vmax.f32 %v100, 1e-24
      %v108 = vmax.f32 %v102, 1e-24
      %v109 = vmax.f32 %v104, 1e-24
      %v110 = vmax.f32 %v106, 1e-24
      %v111 = vrsqrt.pop %v107
      %v112 = vrsqrt.pop %v108
      %v113 = vrsqrt.pop %v109
      %v114 = vrsqrt.pop %v110
      %v115 = vmul.f32 %v63, %v111
      %v116 = vmul.f32 %v64, %v112
      %v117 = vmul.f32 %v65, %v113
      %v118 = vmul.f32 %v66, %v114
      %v119 = vmul.f32 %v91, %v115
      %v120 = vmul.f32 %v92, %v116
      %v121 = vmul.f32 %v93, %v117
      %v122 = vmul.f32 %v94, %v118
      %123 = vadd.xlane.f32.xlu0 %v119
      %v124 = vpop.xlane.xlu0 %123
      %125 = vadd.xlane.f32.xlu0 %v120
      %v126 = vpop.xlane.xlu0 %125
      %127 = vadd.xlane.f32.xlu0 %v121
      %v128 = vpop.xlane.xlu0 %127
      %129 = vadd.xlane.f32.xlu0 %v122
      %v130 = vpop.xlane.xlu0 %129
      %131 = vst [vmem:[#allocation2] sm:$0xff] %v91
      %132 = vst [vmem:[#allocation2 + $0x8] sm:$0xff] %v92
      %133 = vst [vmem:[#allocation2 + $0x10] sm:$0xff] %v93
      %134 = vst [vmem:[#allocation2 + $0x18] sm:$0xff] %v94
      %vm135 = vcmask 7168
      %136 = vst.msk [vmem:[#allocation3] sm:$0xff] %vm135, %v124
      %137 = vst.msk [vmem:[#allocation3 + $0x8] sm:$0xff] %vm135, %v126
      %138 = vst.msk [vmem:[#allocation3 + $0x10] sm:$0xff] %vm135, %v128
      %139 = vst.msk [vmem:[#allocation3 + $0x18] sm:$0xff] %vm135, %v130
      %140 = vst.msk [vmem:[#allocation4] sm:$0xff] %vm135, %v124
      %141 = vst.msk [vmem:[#allocation4 + $0x8] sm:$0xff] %vm135, %v126
      %142 = vst.msk [vmem:[#allocation4 + $0x10] sm:$0xff] %vm135, %v128
      %143 = vst.msk [vmem:[#allocation4 + $0x18] sm:$0xff] %vm135, %v130
      %144 = vst.msk [vmem:[#allocation5] sm:$0xff] %vm135, 1.0
      %145 = vst.msk [vmem:[#allocation5 + $0x8] sm:$0xff] %vm135, 1.0
      %146 = vst.msk [vmem:[#allocation5 + $0x10] sm:$0xff] %vm135, 1.0
      %147 = vst.msk [vmem:[#allocation5 + $0x18] sm:$0xff] %vm135, 1.0
    $region29: #{tpu_custom_call.1} parent=1 // pred_fallthru
      _
    %v148 = vld [vmem:[#allocation10] sm:$0xff]
    %v149 = vld [vmem:[#allocation10 + $0x8] sm:$0xff]
    %v150 = vld [vmem:[#allocation10 + $0x10] sm:$0xff]
    %v151 = vld [vmem:[#allocation10 + $0x18] sm:$0xff]
    %v152 = vld [vmem:[#allocation10 + $0x20] sm:$0xff]
    %v153 = vld [vmem:[#allocation10 + $0x28] sm:$0xff]
    %v154 = vld [vmem:[#allocation10 + $0x30] sm:$0xff]
    %v155 = vld [vmem:[#allocation10 + $0x38] sm:$0xff]
    %v156 = vld [vmem:[#allocation10 + $0x40] sm:$0xff]
    %v157 = vld [vmem:[#allocation10 + $0x48] sm:$0xff]
    %v158 = vld [vmem:[#allocation10 + $0x50] sm:$0xff]
    %v159 = vld [vmem:[#allocation10 + $0x58] sm:$0xff]
    %v160 = vld [vmem:[#allocation10 + $0x60] sm:$0xff]
    %v161 = vld [vmem:[#allocation10 + $0x68] sm:$0xff]
    %v162 = vld [vmem:[#allocation10 + $0x70] sm:$0xff]
    %v163 = vld [vmem:[#allocation10 + $0x78] sm:$0xff]
    %v164 = vmul.f32 %v148, %v148
    %v165 = vmul.f32 %v149, %v149
    %v166 = vmul.f32 %v150, %v150
    %v167 = vmul.f32 %v151, %v151
    %v168 = vmul.f32 %v152, %v152
    %v169 = vmul.f32 %v153, %v153
    %v170 = vmul.f32 %v154, %v154
    %v171 = vmul.f32 %v155, %v155
    %v172 = vmul.f32 %v156, %v156
    %v173 = vmul.f32 %v157, %v157
    %v174 = vmul.f32 %v158, %v158
    %v175 = vmul.f32 %v159, %v159
    %v176 = vmul.f32 %v160, %v160
    %v177 = vmul.f32 %v161, %v161
    %v178 = vmul.f32 %v162, %v162
    %v179 = vmul.f32 %v163, %v163
    %180 = vadd.xlane.f32.xlu0 %v164
    %v181 = vpop.xlane.xlu0 %180
    %182 = vadd.xlane.f32.xlu0 %v165
    %v183 = vpop.xlane.xlu0 %182
    %184 = vadd.xlane.f32.xlu0 %v166
    %v185 = vpop.xlane.xlu0 %184
    %186 = vadd.xlane.f32.xlu0 %v167
    %v187 = vpop.xlane.xlu0 %186
    %188 = vadd.xlane.f32.xlu0 %v168
    %v189 = vpop.xlane.xlu0 %188
    %190 = vadd.xlane.f32.xlu0 %v169
    %v191 = vpop.xlane.xlu0 %190
    %192 = vadd.xlane.f32.xlu0 %v170
    %v193 = vpop.xlane.xlu0 %192
    %194 = vadd.xlane.f32.xlu0 %v171
    %v195 = vpop.xlane.xlu0 %194
    %196 = vadd.xlane.f32.xlu0 %v172
    %v197 = vpop.xlane.xlu0 %196
    %198 = vadd.xlane.f32.xlu0 %v173
    %v199 = vpop.xlane.xlu0 %198
    %200 = vadd.xlane.f32.xlu0 %v174
    %v201 = vpop.xlane.xlu0 %200
    %202 = vadd.xlane.f32.xlu0 %v175
    %v203 = vpop.xlane.xlu0 %202
    %204 = vadd.xlane.f32.xlu0 %v176
    %v205 = vpop.xlane.xlu0 %204
    %206 = vadd.xlane.f32.xlu0 %v177
    %v207 = vpop.xlane.xlu0 %206
    %208 = vadd.xlane.f32.xlu0 %v178
    %v209 = vpop.xlane.xlu0 %208
    %210 = vadd.xlane.f32.xlu0 %v179
    %v211 = vpop.xlane.xlu0 %210
    %v212 = vmax.f32 %v181, 1e-24
    %v213 = vmax.f32 %v183, 1e-24
    %v214 = vmax.f32 %v185, 1e-24
    %v215 = vmax.f32 %v187, 1e-24
    %v216 = vmax.f32 %v189, 1e-24
    %v217 = vmax.f32 %v191, 1e-24
    %v218 = vmax.f32 %v193, 1e-24
    %v219 = vmax.f32 %v195, 1e-24
    %v220 = vmax.f32 %v197, 1e-24
    %v221 = vmax.f32 %v199, 1e-24
    %v222 = vmax.f32 %v201, 1e-24
    %v223 = vmax.f32 %v203, 1e-24
    %v224 = vmax.f32 %v205, 1e-24
    %v225 = vmax.f32 %v207, 1e-24
    %v226 = vmax.f32 %v209, 1e-24
    %v227 = vmax.f32 %v211, 1e-24
    %v228 = vrsqrt.pop %v212
    %v229 = vrsqrt.pop %v213
    %v230 = vrsqrt.pop %v214
    %v231 = vrsqrt.pop %v215
    %v232 = vrsqrt.pop %v216
    %v233 = vrsqrt.pop %v217
    %v234 = vrsqrt.pop %v218
    %v235 = vrsqrt.pop %v219
    %v236 = vrsqrt.pop %v220
    %v237 = vrsqrt.pop %v221
    %v238 = vrsqrt.pop %v222
    %v239 = vrsqrt.pop %v223
    %v240 = vrsqrt.pop %v224
    %v241 = vrsqrt.pop %v225
    %v242 = vrsqrt.pop %v226
    %v243 = vrsqrt.pop %v227
    %v244 = vmul.f32 %v148, %v228
    %v245 = vmul.f32 %v149, %v229
    %v246 = vmul.f32 %v150, %v230
    %v247 = vmul.f32 %v151, %v231
    %v248 = vmul.f32 %v152, %v232
    %v249 = vmul.f32 %v153, %v233
    %v250 = vmul.f32 %v154, %v234
    %v251 = vmul.f32 %v155, %v235
    %v252 = vmul.f32 %v156, %v236
    %v253 = vmul.f32 %v157, %v237
    %v254 = vmul.f32 %v158, %v238
    %v255 = vmul.f32 %v159, %v239
    %v256 = vmul.f32 %v160, %v240
    %v257 = vmul.f32 %v161, %v241
    %v258 = vmul.f32 %v162, %v242
    %v259 = vmul.f32 %v163, %v243
    %v260 = vld [vmem:[#allocation2] sm:$0xff]
    %v261 = vld [vmem:[#allocation2 + $0x8] sm:$0xff]
    %v262 = vld [vmem:[#allocation2 + $0x10] sm:$0xff]
    %v263 = vld [vmem:[#allocation2 + $0x18] sm:$0xff]
    %264 = vmatprep.subr.mxu0 0.0
    %265 = vmatpush1.xpose.msra.mxu0 %v244
    %266 = vmatprep.subr.mxu0 0.0
    %267 = vmatpush1.xpose.msra.mxu0 %v245
    %268 = vmatprep.subr.mxu0 0.0
    %269 = vmatpush1.xpose.msra.mxu0 %v246
    %270 = vmatprep.subr.mxu0 0.0
    %271 = vmatpush1.xpose.msra.mxu0 %v247
    %272 = vmatprep.subr.mxu0 0.0
    %273 = vmatpush1.xpose.msra.mxu0 %v248
    %274 = vmatprep.subr.mxu0 0.0
    %275 = vmatpush1.xpose.msra.mxu0 %v249
    %276 = vmatprep.subr.mxu0 0.0
    %277 = vmatpush1.xpose.msra.mxu0 %v250
    %278 = vmatprep.subr.mxu0 0.0
    %279 = vmatpush1.xpose.msra.mxu0 %v251
    %280 = vmatprep.subr.mxu0 0.0
    %281 = vmatpush1.xpose.msra.mxu0 %v252
    %282 = vmatprep.subr.mxu0 0.0
    %283 = vmatpush1.xpose.msra.mxu0 %v253
    %284 = vmatprep.subr.mxu0 0.0
    %285 = vmatpush1.xpose.msra.mxu0 %v254
    %286 = vmatprep.subr.mxu0 0.0
    %287 = vmatpush1.xpose.msra.mxu0 %v255
    %288 = vmatprep.subr.mxu0 0.0
    %289 = vmatpush1.xpose.msra.mxu0 %v256
    %290 = vmatprep.subr.mxu0 0.0
    %291 = vmatpush1.xpose.msra.mxu0 %v257
    %292 = vmatprep.subr.mxu0 0.0
    %293 = vmatpush1.xpose.msra.mxu0 %v258
    %294 = vmatprep.subr.mxu0 0.0
    %295 = vmatpush1.xpose.msra.mxu0 %v259
    %296 = vmatprep.subr.mxu0 0.0
    %297 = vmatpush1.xpose.msra.mxu0 0.0
    %298 = vmatprep.subr.mxu0 0.0
    %299 = vmatpush1.xpose.msra.mxu0 0.0
    %300 = vmatprep.subr.mxu0 0.0
    %301 = vmatpush1.xpose.msra.mxu0 0.0
    %302 = vmatprep.subr.mxu0 0.0
    %303 = vmatpush1.xpose.msra.mxu0 0.0
    %304 = vmatprep.subr.mxu0 0.0
    %305 = vmatpush1.xpose.msra.mxu0 0.0
    %306 = vmatprep.subr.mxu0 0.0
    %307 = vmatpush1.xpose.msra.mxu0 0.0
    %308 = vmatprep.subr.mxu0 0.0
    %309 = vmatpush1.xpose.msra.mxu0 0.0
    %310 = vmatprep.subr.mxu0 0.0
    %311 = vmatpush1.xpose.msra.mxu0 0.0
    %312 = vmatprep.subr.mxu0 0.0
    %313 = vmatpush1.xpose.msra.mxu0 0.0
    %314 = vmatprep.subr.mxu0 0.0
    %315 = vmatpush1.xpose.msra.mxu0 0.0
    %316 = vmatprep.subr.mxu0 0.0
    %317 = vmatpush1.xpose.msra.mxu0 0.0
    %318 = vmatprep.subr.mxu0 0.0
    %319 = vmatpush1.xpose.msra.mxu0 0.0
    %320 = vmatprep.subr.mxu0 0.0
    %321 = vmatpush1.xpose.msra.mxu0 0.0
    %322 = vmatprep.subr.mxu0 0.0
    %323 = vmatpush1.xpose.msra.mxu0 0.0
    %324 = vmatprep.subr.mxu0 0.0
    %325 = vmatpush1.xpose.msra.mxu0 0.0
    %326 = vmatprep.subr.mxu0 0.0
    %327 = vmatpush1.xpose.msra.mxu0 0.0
    %328 = vmatprep.mubr.f32.mxu0 0.0
    %329 = vmatmul.mubr.f32.gmra.mrb[0].mxu0 %v260
    %v330 = vpop.f32.mrb[0].mxu0
    %v331 = vadd.f32 0.0, %v330
    %v332 = vpop.f32.mrb[0].mxu0
    %333 = vmatprep.mubr.f32.mxu0 0.0
    %334 = vmatmul.mubr.f32.gmra.mrb[0].mxu0 %v261
    %v335 = vpop.f32.mrb[0].mxu0
    %v336 = vadd.f32 0.0, %v335
    %v337 = vpop.f32.mrb[0].mxu0
    %338 = vmatprep.mubr.f32.mxu0 0.0
    %339 = vmatmul.mubr.f32.gmra.mrb[0].mxu0 %v262
    %v340 = vpop.f32.mrb[0].mxu0
    %v341 = vadd.f32 0.0, %v340
    %v342 = vpop.f32.mrb[0].mxu0
    %343 = vmatprep.mubr.f32.mxu0 0.0
    %344 = vmatmul.mubr.f32.gmra.mrb[0].mxu0 %v263
    %v345 = vpop.f32.mrb[0].mxu0
    %v346 = vadd.f32 0.0, %v345
    %v347 = vpop.f32.mrb[0].mxu0
    %348 = vdwg.mxu0
    %s349 = smul.u32 0, 128
    %v350 = vlaneseq
    %v351 = vand.u32 %v350, 127
    %v352 = vstv %s349
    %v353 = vadd.s32 %v352, %v351
    %vm354 = vcmp.lt.s32.totalorder %v353, 48
    %v355 = vsel %vm354, %v331, -1e+30
    %v356 = vsel %vm354, %v336, -1e+30
    %v357 = vsel %vm354, %v341, -1e+30
    %v358 = vsel %vm354, %v346, -1e+30
    %v359 = vld [vmem:[#allocation4] sm:$0xff]
    %v360 = vld [vmem:[#allocation4 + $0x8] sm:$0xff]
    %v361 = vld [vmem:[#allocation4 + $0x10] sm:$0xff]
    %v362 = vld [vmem:[#allocation4 + $0x18] sm:$0xff]
    %363 = vmax.xlane.f32.xlu0 %v355
    %v364 = vpop.xlane.xlu0 %363
    %365 = vmax.xlane.f32.xlu0 %v356
    %v366 = vpop.xlane.xlu0 %365
    %367 = vmax.xlane.f32.xlu0 %v357
    %v368 = vpop.xlane.xlu0 %367
    %369 = vmax.xlane.f32.xlu0 %v358
    %v370 = vpop.xlane.xlu0 %369
    %v371 = vmax.f32 %v359, %v364
    %v372 = vmax.f32 %v360, %v366
    %v373 = vmax.f32 %v361, %v368
    %v374 = vmax.f32 %v362, %v370
    %v375 = vld [vmem:[#allocation5] sm:$0xff]
    %v376 = vld [vmem:[#allocation5 + $0x8] sm:$0xff]
    %v377 = vld [vmem:[#allocation5 + $0x10] sm:$0xff]
    %v378 = vld [vmem:[#allocation5 + $0x18] sm:$0xff]
    %v379 = vsub.f32 %v359, %v371
    %v380 = vsub.f32 %v360, %v372
    %v381 = vsub.f32 %v361, %v373
    %v382 = vsub.f32 %v362, %v374
    %v383 = vmul.f32 %v379, 1.442695
    %v384 = vpow.pop %v383
    %v385 = vmul.f32 %v380, 1.442695
    %v386 = vpow.pop %v385
    %v387 = vmul.f32 %v381, 1.442695
    %v388 = vpow.pop %v387
    %v389 = vmul.f32 %v382, 1.442695
    %v390 = vpow.pop %v389
    %v391 = vmul.f32 %v375, %v384
    %v392 = vmul.f32 %v376, %v386
    %v393 = vmul.f32 %v377, %v388
    %v394 = vmul.f32 %v378, %v390
    %396 = vset.pattern.permute.xlu0 0
    %397 = vperm.xlu0 %396, %v371
    %v398 = vpop.permute.xlu0 %397
    %401 = vset.pattern.permute.xlu0 0
    %402 = vperm.xlu0 %401, %v372
    %v403 = vpop.permute.xlu0 %402
    %406 = vset.pattern.permute.xlu0 0
    %407 = vperm.xlu0 %406, %v373
    %v408 = vpop.permute.xlu0 %407
    %411 = vset.pattern.permute.xlu0 0
    %412 = vperm.xlu0 %411, %v374
    %v413 = vpop.permute.xlu0 %412
    %v415 = vsub.f32 %v355, %v398
    %v416 = vsub.f32 %v356, %v403
    %v417 = vsub.f32 %v357, %v408
    %v418 = vsub.f32 %v358, %v413
    %v419 = vmul.f32 %v415, 1.442695
    %v420 = vpow.pop %v419
    %v421 = vmul.f32 %v416, 1.442695
    %v422 = vpow.pop %v421
    %v423 = vmul.f32 %v417, 1.442695
    %v424 = vpow.pop %v423
    %v425 = vmul.f32 %v418, 1.442695
    %v426 = vpow.pop %v425
    %427 = vadd.xlane.f32.xlu0 %v420
    %v428 = vpop.xlane.xlu0 %427
    %429 = vadd.xlane.f32.xlu0 %v422
    %v430 = vpop.xlane.xlu0 %429
    %431 = vadd.xlane.f32.xlu0 %v424
    %v432 = vpop.xlane.xlu0 %431
    %433 = vadd.xlane.f32.xlu0 %v426
    %v434 = vpop.xlane.xlu0 %433
    %v435 = vadd.f32 %v391, %v428
    %v436 = vadd.f32 %v392, %v430
    %v437 = vadd.f32 %v393, %v432
    %v438 = vadd.f32 %v394, %v434
    %vm439 = vcmask 7168
    %440 = vst.msk [vmem:[#allocation5] sm:$0xff] %vm439, %v435
    %441 = vst.msk [vmem:[#allocation5 + $0x8] sm:$0xff] %vm439, %v436
    %442 = vst.msk [vmem:[#allocation5 + $0x10] sm:$0xff] %vm439, %v437
    %443 = vst.msk [vmem:[#allocation5 + $0x18] sm:$0xff] %vm439, %v438
    %444 = vst.msk [vmem:[#allocation4] sm:$0xff] %vm439, %v371
    %445 = vst.msk [vmem:[#allocation4 + $0x8] sm:$0xff] %vm439, %v372
    %446 = vst.msk [vmem:[#allocation4 + $0x10] sm:$0xff] %vm439, %v373
    %447 = vst.msk [vmem:[#allocation4 + $0x18] sm:$0xff] %vm439, %v374
    // Predicated region
    $region30: #{tpu_custom_call.1} parent=1 // pred_check
      %p448 = pneg %p55
    $region31: #{tpu_custom_call.1} parent=1 // pred_check_branch
      %450 = sbr.rel (%p448) target = $region33
    $region32: #{tpu_custom_call.1} parent=1 // pred_region
      %v451 = vld [vmem:[#allocation4] sm:$0xff]
      %v452 = vld [vmem:[#allocation4 + $0x8] sm:$0xff]
      %v453 = vld [vmem:[#allocation4 + $0x10] sm:$0xff]
      %v454 = vld [vmem:[#allocation4 + $0x18] sm:$0xff]
      %v455 = vld [vmem:[#allocation5] sm:$0xff]
      %v456 = vld [vmem:[#allocation5 + $0x8] sm:$0xff]
      %v457 = vld [vmem:[#allocation5 + $0x10] sm:$0xff]
      %v458 = vld [vmem:[#allocation5 + $0x18] sm:$0xff]
      %v459 = vlog2.pop %v455
      %v460 = vmul.f32 %v459, 0.6931472
      %v461 = vlog2.pop %v456
      %v462 = vmul.f32 %v461, 0.6931472
      %v463 = vlog2.pop %v457
      %v464 = vmul.f32 %v463, 0.6931472
      %v465 = vlog2.pop %v458
      %v466 = vmul.f32 %v465, 0.6931472
      %v467 = vadd.f32 %v451, %v460
      %v468 = vadd.f32 %v452, %v462
      %v469 = vadd.f32 %v453, %v464
      %v470 = vadd.f32 %v454, %v466
      %v471 = vld [vmem:[#allocation3] sm:$0xff]
      %v472 = vld [vmem:[#allocation3 + $0x8] sm:$0xff]
      %v473 = vld [vmem:[#allocation3 + $0x10] sm:$0xff]
      %v474 = vld [vmem:[#allocation3 + $0x18] sm:$0xff]
      %v475 = vsub.f32 %v467, %v471
      %v476 = vsub.f32 %v468, %v472
      %v477 = vsub.f32 %v469, %v473
      %v478 = vsub.f32 %v470, %v474
      %479 = vst.msk [vmem:[%s3] sm:$0xff] %vm439, %v475
      %480 = vst.msk [vmem:[%s3 + $0x8] sm:$0xff] %vm439, %v476
      %481 = vst.msk [vmem:[%s3 + $0x10] sm:$0xff] %vm439, %v477
      %482 = vst.msk [vmem:[%s3 + $0x18] sm:$0xff] %vm439, %v478
    $region33: #{tpu_custom_call.1} parent=1 // pred_fallthru
      _
    // Predicated region
    $region34: #{tpu_custom_call.1} parent=1 // pred_check
      _
    $region35: #{tpu_custom_call.1} parent=1 // pred_check_branch
      %484 = sbr.rel (0) target = $region37
    $region36: #{tpu_custom_call.1} parent=1 // pred_region
      _
    $region37: #{tpu_custom_call.1} parent=1 // pred_fallthru
      _
    // Predicated region
    $region38: #{tpu_custom_call.1} parent=1 // pred_check
      _
    $region39: #{tpu_custom_call.1} parent=1 // pred_check_branch
      %486 = sbr.rel (0) target = $region41
    $region40: #{tpu_custom_call.1} parent=1 // pred_region
      _
    $region41: #{tpu_custom_call.1} parent=1 // pred_fallthru
      _
    %487 = vsyncpa [#allocation7], 1
    %488 = vsyncpa [#allocation9], 1

</llo_original>
